<compile_context>
chip_gen: v5e
topology: v5e:2x2
jax: 0.10.0
libtpu: 0.0.40
codegen_flags: <defaults>
</compile_context>

<pallas_src>
import functools

import jax
import jax.numpy as jnp
import numpy as np
from jax.experimental import pallas as pl
from jax.experimental.pallas import tpu as pltpu


def _argmax_kernel(v_total, em_ref, out_ref, maxv_ref):
    """Per (T-tile, V-tile) step: fold this V-tile into the running (max, argmax).

    Grid = (num_T_tiles [parallel], num_V_tiles [arbitrary, innermost]).
    out_ref (int32 (tile_T, 1)) is resident across the V axis and holds the running
    argmax; maxv_ref (f32 (tile_T, 1)) scratch holds the running max value.
    """
    j = pl.program_id(1)
    nv = pl.num_programs(1)
    tile_t, tile_v = em_ref.shape

    logits = em_ref[...].astype(jnp.float32)                        # (tile_T, tile_V)

    # Global label index of every lane in this V-tile; mask lanes past the real vocab
    # (covers both a partial last V-tile and non-128-multiple vocab sizes).
    lane = jax.lax.broadcasted_iota(jnp.int32, (tile_t, tile_v), 1) + j * tile_v
    in_range = lane < v_total
    logits = jnp.where(in_range, logits, -jnp.inf)

    # Fused per-tile max + first-max index (matches torch / numpy tie-breaking).
    tile_max = jnp.max(logits, axis=-1, keepdims=True)              # (tile_T, 1)
    sentinel = jnp.int32(jnp.iinfo(jnp.int32).max)
    tile_arg = jnp.min(
        jnp.where(jnp.logical_and(logits == tile_max, in_range), lane, sentinel),
        axis=-1, keepdims=True)                                     # (tile_T, 1)

    @pl.when(j == 0)
    def _():
        maxv_ref[...] = tile_max
        out_ref[...] = tile_arg

    @pl.when(j > 0)
    def _():
        # Strictly-greater keeps the earlier (lower-index) tile on ties -> first-max.
        better = tile_max > maxv_ref[...]
        maxv_ref[...] = jnp.where(better, tile_max, maxv_ref[...])
        out_ref[...] = jnp.where(better, tile_arg, out_ref[...])


def greedy_ctc_argmax_pallas(emission, *, max_tile_t=1024, max_tile_v=512):
    """Row-wise argmax over the label axis. emission: (T, V) float. Returns (T,) int32."""
    T, V = emission.shape
    tile_t = min(T, max_tile_t)          # T <= max -> full dim; else 8-aligned tile
    tile_v = min(V, max_tile_v)          # V <= max -> full dim; else 128-aligned tile
    nt = pl.cdiv(T, tile_t)
    nv = pl.cdiv(V, tile_v)

    kernel = functools.partial(_argmax_kernel, V)
    out = pl.pallas_call(
        kernel,
        out_shape=jax.ShapeDtypeStruct((T, 1), jnp.int32),
        grid_spec=pltpu.PrefetchScalarGridSpec(
            num_scalar_prefetch=0,
            grid=(nt, nv),
            in_specs=[pl.BlockSpec((tile_t, tile_v), lambda i, j: (i, j))],
            out_specs=pl.BlockSpec((tile_t, 1), lambda i, j: (i, 0)),
            scratch_shapes=[pltpu.VMEM((tile_t, 1), jnp.float32)],
        ),
        compiler_params=pltpu.CompilerParams(
            # T-tiles are independent -> megacore-shardable on v7x; V carries the
            # running (max, argmax) accumulator -> arbitrary.
            dimension_semantics=("parallel", "arbitrary"),
            # 2 MiB input tile, double-buffered: comfortably under this on all gens
            # (and well under v7x's 64 MiB physical VMEM).
            vmem_limit_bytes=32 * 1024 * 1024,
        ),
    )(emission)
    return out[:, 0]


@functools.partial(jax.jit, static_argnames=("blank_id",))
def _greedy_argmax_keep(emission, blank_id=0):
    """Argmax (Pallas) + dedup/blank keep-mask (plain jnp, O(T), negligible)."""
    idx = greedy_ctc_argmax_pallas(emission)
    prev = jnp.concatenate([jnp.full((1,), -1, idx.dtype), idx[:-1]])
    keep = jnp.logical_and(idx != prev, idx != jnp.int32(blank_id))
    return idx, keep


class GreedyCTCDecoderPallas:
    """JAX/Pallas port of lcasr.decoding.greedy.GreedyCTCDecoder."""

    def __init__(self, tokenizer=None, blank_id=0):
        self.tokenizer = tokenizer
        self.blank = blank_id

    def __call__(self, emission, decode=True):
        decode = decode and self.tokenizer is not None
        idx, keep = _greedy_argmax_keep(jnp.asarray(emission), blank_id=self.blank)
        idx, keep = jax.block_until_ready((idx, keep))
        # Variable-length compaction (data-dependent output length) stays on host,
        # but vectorized (no per-element Python loop).
        indices = np.asarray(idx)[np.asarray(keep)].tolist()
        return self.tokenizer.decode(indices) if decode else indices


def _reference(emission_np, blank_id=0):
    """Pure-numpy reference reproducing the torch forward exactly."""
    indices = np.argmax(emission_np, axis=-1).tolist()
    dedup = [v for i, v in enumerate(indices) if i == 0 or v != indices[i - 1]]
    return [i for i in dedup if i != blank_id]


if __name__ == "__main__":
    # No parameters in this module (tokenizer=None, blank_id=0).
    T, V = 8, 32  # num_seq=8, num_label=32
    key = jax.random.PRNGKey(0)
    emission = jax.random.normal(key, (T, V), dtype=jnp.float32)
    # Force some consecutive duplicates and blanks so dedup/blank paths are hit.
    emission = emission.at[2, :].set(emission[1, :])
    emission = emission.at[4, 0].set(100.0)   # blank at t=4
    emission = emission.at[5, 0].set(100.0)   # blank at t=5

    decoder = GreedyCTCDecoderPallas(tokenizer=None, blank_id=0)
    out = decoder(emission)  # list of ints (decode path disabled: no tokenizer)
    ref = _reference(np.asarray(emission), blank_id=0)
    assert out == ref, f"mismatch: pallas={out} ref={ref}"

    # Also exercise the tiled path (multiple T-tiles and V-tiles) at small shapes
    # to validate the cross-tile (max, argmax) carry.
    T2, V2 = 32, 256
    em2 = jax.random.normal(jax.random.PRNGKey(1), (T2, V2), dtype=jnp.float32)
    idx2 = jax.block_until_ready(
        greedy_ctc_argmax_pallas(em2, max_tile_t=16, max_tile_v=128))
    np.testing.assert_array_equal(np.asarray(idx2),
                                  np.argmax(np.asarray(em2), axis=-1))

    print("KERNEL_OK")
</pallas_src>

<mosaic_0001>
module attributes {stable_mosaic.version = 11 : i64} {
  func.func @_argmax_kernel(%arg0: i32, %arg1: i32, %arg2: memref<8x32xf32, #tpu.memory_space<vmem>>, %arg3: memref<8x1xi32, #tpu.memory_space<vmem>>, %arg4: memref<8x1xf32, #tpu.memory_space<vmem>>) attributes {dimension_semantics = [#tpu.dimension_semantics<parallel>, #tpu.dimension_semantics<arbitrary>], iteration_bounds = array<i64: 1, 1>, scalar_prefetch = 0 : i64, scratch_operands = 1 : i64, tpu.core_type = #tpu.core_type<tc>, window_params = [{transform_indices = @transform_0, window_bounds = array<i64: 8, 32>}, {transform_indices = @transform_1, window_bounds = array<i64: 8, 1>}]} {
    %c0 = arith.constant 0 : index
    %c0_0 = arith.constant 0 : index
    %0 = vector.load %arg2[%c0, %c0_0] : memref<8x32xf32, #tpu.memory_space<vmem>>, vector<8x32xf32>
    %1 = tpu.iota {dimensions = array<i32: 1>} : vector<8x32xi32>
    %c32_i32 = arith.constant 32 : i32
    %2 = arith.muli %arg1, %c32_i32 : i32
    %3 = vector.broadcast %2 : i32 to vector<8x32xi32>
    %4 = arith.addi %1, %3 : vector<8x32xi32>
    %c32_i32_1 = arith.constant 32 : i32
    %5 = vector.broadcast %c32_i32_1 : i32 to vector<8x32xi32>
    %6 = arith.cmpi slt, %4, %5 : vector<8x32xi32>
    %cst = arith.constant 0xFF800000 : f32
    %7 = vector.broadcast %cst : f32 to vector<8x32xf32>
    %8 = arith.select %6, %0, %7 : vector<8x32xi1>, vector<8x32xf32>
    %cst_2 = arith.constant dense<0xFF800000> : vector<8xf32>
    %9 = vector.multi_reduction <maximumf>, %8, %cst_2 [1] : vector<8x32xf32> to vector<8xf32>
    %10 = vector.shape_cast %9 : vector<8xf32> to vector<8x1xf32>
    %11 = vector.broadcast %10 : vector<8x1xf32> to vector<8x32xf32>
    %12 = arith.cmpf oeq, %8, %11 : vector<8x32xf32>
    %13 = arith.andi %12, %6 : vector<8x32xi1>
    %c2147483647_i32 = arith.constant 2147483647 : i32
    %14 = vector.broadcast %c2147483647_i32 : i32 to vector<8x32xi32>
    %15 = arith.select %13, %4, %14 : vector<8x32xi1>, vector<8x32xi32>
    %cst_3 = arith.constant dense<2147483647> : vector<8xi32>
    %16 = vector.multi_reduction <minsi>, %15, %cst_3 [1] : vector<8x32xi32> to vector<8xi32>
    %17 = vector.shape_cast %16 : vector<8xi32> to vector<8x1xi32>
    %c0_i32 = arith.constant 0 : i32
    %18 = arith.cmpi eq, %arg1, %c0_i32 : i32
    %19 = arith.extui %18 : i1 to i32
    %c0_i32_4 = arith.constant 0 : i32
    %20 = arith.cmpi ne, %19, %c0_i32_4 : i32
    scf.if %20 {
      %c0_7 = arith.constant 0 : index
      %c0_8 = arith.constant 0 : index
      %24 = vector.load %arg4[%c0_7, %c0_8] : memref<8x1xf32, #tpu.memory_space<vmem>>, vector<8x1xf32>
      tpu.vector_store %arg4[%c0_7, %c0_8], %10 {strides = array<i32>} : memref<8x1xf32, #tpu.memory_space<vmem>>, vector<8x1xf32>,
      %c0_9 = arith.constant 0 : index
      %c0_10 = arith.constant 0 : index
      %25 = vector.load %arg3[%c0_9, %c0_10] : memref<8x1xi32, #tpu.memory_space<vmem>>, vector<8x1xi32>
      tpu.vector_store %arg3[%c0_9, %c0_10], %17 {strides = array<i32>} : memref<8x1xi32, #tpu.memory_space<vmem>>, vector<8x1xi32>,
    } else {
    }
    %c0_i32_5 = arith.constant 0 : i32
    %21 = arith.cmpi sgt, %arg1, %c0_i32_5 : i32
    %22 = arith.extui %21 : i1 to i32
    %c0_i32_6 = arith.constant 0 : i32
    %23 = arith.cmpi ne, %22, %c0_i32_6 : i32
    scf.if %23 {
      %c0_7 = arith.constant 0 : index
      %c0_8 = arith.constant 0 : index
      %24 = vector.load %arg4[%c0_7, %c0_8] : memref<8x1xf32, #tpu.memory_space<vmem>>, vector<8x1xf32>
      %25 = arith.cmpf ogt, %10, %24 : vector<8x1xf32>
      %c0_9 = arith.constant 0 : index
      %c0_10 = arith.constant 0 : index
      %26 = vector.load %arg4[%c0_9, %c0_10] : memref<8x1xf32, #tpu.memory_space<vmem>>, vector<8x1xf32>
      %27 = arith.select %25, %10, %26 : vector<8x1xi1>, vector<8x1xf32>
      %c0_11 = arith.constant 0 : index
      %c0_12 = arith.constant 0 : index
      %28 = vector.load %arg4[%c0_11, %c0_12] : memref<8x1xf32, #tpu.memory_space<vmem>>, vector<8x1xf32>
      tpu.vector_store %arg4[%c0_11, %c0_12], %27 {strides = array<i32>} : memref<8x1xf32, #tpu.memory_space<vmem>>, vector<8x1xf32>,
      %c0_13 = arith.constant 0 : index
      %c0_14 = arith.constant 0 : index
      %29 = vector.load %arg3[%c0_13, %c0_14] : memref<8x1xi32, #tpu.memory_space<vmem>>, vector<8x1xi32>
      %30 = arith.select %25, %17, %29 : vector<8x1xi1>, vector<8x1xi32>
      %c0_15 = arith.constant 0 : index
      %c0_16 = arith.constant 0 : index
      %31 = vector.load %arg3[%c0_15, %c0_16] : memref<8x1xi32, #tpu.memory_space<vmem>>, vector<8x1xi32>
      tpu.vector_store %arg3[%c0_15, %c0_16], %30 {strides = array<i32>} : memref<8x1xi32, #tpu.memory_space<vmem>>, vector<8x1xi32>,
    } else {
    }
    return
  }
  func.func @transform_0(%arg0: i32, %arg1: i32) -> (i32, i32) {
    %c0_i32 = arith.constant 0 : i32
    return %arg0, %arg1 : i32, i32
  }
  func.func @transform_1(%arg0: i32, %arg1: i32) -> (i32, i32) {
    %c0_i32 = arith.constant 0 : i32
    %c0_i32_0 = arith.constant 0 : i32
    return %arg0, %c0_i32 : i32, i32
  }
}

</mosaic_0001>

<llo_original>
// kernel: _greedy_argmax_keep.1
$region0: #{_greedy_argmax_keep.1}
  #allocation0 [shape = 'u32[]', space=smem, size = 0x4, offset = 0x4, fixed_abs, tag = 'smem constant byte address 0x4 - core index']
  #allocation1 [shape = 'u32[72,128]{1,0:T(1,128)}', space=vmem, size = 0x9000, scoped, tag = 'internal scratch']
  #allocation2 [shape = 'f32[8,1]{1,0:T(8,128)}', space=vmem, size = 0x1000, scoped, tag = 'scratch operand']
  %s0 = inlined_call_operand.hbm [shape: f32[8,32], index: 0, kind: input, shape index: {}]
  %s1 = inlined_call_operand.vmem [shape: s32[8,1], index: 1, kind: output, shape index: {}]
  %s2 = sld [smem:[#allocation0]]
  $region26: #{_greedy_argmax_keep.1} parent=0
    _
  %s4 = ssub.s32 1, %s2
  %s5 = scalar_select 0, %s4, %s2
  $region1: #{_greedy_argmax_keep.1} parent=0
    #allocation3 [shape = 'u8[4096]{0}', space=vmem, size = 0x1000, scoped, tag = 'input window, operand 0, single buffered']
    #allocation4 [shape = 's32[1]{0}', space=sflag, size = 0x4, scoped, tag = 'scoped memory for _greedy_argmax_keep.1']
    %6 = vsyncpa [#allocation4], 0
    // Predicated region
    $region2: #{_greedy_argmax_keep.1} parent=1 // pred_check
      _
    $region3: #{_greedy_argmax_keep.1} parent=1 // pred_check_branch
      %8 = sbr.rel (0) target = $region5
    $region4: #{_greedy_argmax_keep.1} parent=1 // pred_region
      %10 = vsyncadd [#allocation4], 0
      %s12 = sshll.u32 %s0, 4
      %s13 = int_to_ptr.hbm [resolvable:$true] %s12
      %s14 = sshll.u32 [#allocation3], 4
      %s15 = int_to_ptr.vmem [resolvable:$true] %s14
      %17 = dma.hbm_to_vmem [thread:$0]  %s13, 128, %s15, [#allocation4]
    $region5: #{_greedy_argmax_keep.1} parent=1 // pred_fallthru
      _
    // Predicated region
    $region6: #{_greedy_argmax_keep.1} parent=1 // pred_check
      _
    $region7: #{_greedy_argmax_keep.1} parent=1 // pred_check_branch
      %19 = sbr.rel (0) target = $region9
    $region8: #{_greedy_argmax_keep.1} parent=1 // pred_region
      %21 = dma.done [#allocation4], 128
    $region9: #{_greedy_argmax_keep.1} parent=1 // pred_fallthru
      _
    %v22 = vld [vmem:[#allocation3] sm:$0xff]
    %v23 = vlaneseq
    %v24 = vand.u32 %v23, 127
    %s25 = smul.u32 0, 32
    %v26 = vstv %s25
    %v27 = vadd.s32 %v24, %v26
    %vm28 = vcmp.lt.s32.totalorder %v27, 32
    %v29 = vsel %vm28, %v22, -inf
    %vm30 = vcmask 261120
    %v31 = vsel %vm30, %v29, -inf
    %32 = vmax.xlane.f32.xlu0 %v31
    %v33 = vpop.xlane.xlu0 %32
    %vm34 = vcmp.eq.f32.partialorder %v29, %v33
    %vm35 = vmand %vm34, %vm28
    %v36 = vsel %vm35, %v27, 2147483647
    %v37 = vsel %vm30, %v36, 2147483647
    %v38 = vand.u32 %v37, 65535
    %v39 = vshra.s32 %v37, 16
    %v40 = vcvt.s32.f32 %v38
    %v41 = vcvt.s32.f32 %v39
    %42 = vmin.xlane.f32.xlu0 %v41
    %v43 = vpop.xlane.xlu0 %42
    %vm44 = vcmp.eq.f32.partialorder %v41, %v43
    %v45 = vsel %vm44, %v40, inf
    %46 = vmin.xlane.f32.xlu0 %v45
    %v47 = vpop.xlane.xlu0 %46
    %v48 = vcvt.f32.s32 %v47
    %v49 = vcvt.f32.s32 %v43
    %v50 = vshll.u32 %v49, 16
    %v51 = vadd.s32 %v50, %v48
    %p52 = scmp.eq.s32.totalorder 0, 0
    // Predicated region
    $region10: #{_greedy_argmax_keep.1} parent=1 // pred_check
      %p53 = pneg %p52
    $region11: #{_greedy_argmax_keep.1} parent=1 // pred_check_branch
      %55 = sbr.rel (%p53) target = $region13
    $region12: #{_greedy_argmax_keep.1} parent=1 // pred_region
      %vm56 = vcmask 7168
      %57 = vst.msk [vmem:[#allocation2] sm:$0xff] %vm56, %v33
      %58 = vst.msk [vmem:[%s1] sm:$0xff] %vm56, %v51
    $region13: #{_greedy_argmax_keep.1} parent=1 // pred_fallthru
      _
    %p59 = scmp.gt.s32.totalorder 0, 0
    // Predicated region
    $region14: #{_greedy_argmax_keep.1} parent=1 // pred_check
      %p60 = pneg %p59
    $region15: #{_greedy_argmax_keep.1} parent=1 // pred_check_branch
      %62 = sbr.rel (%p60) target = $region17
    $region16: #{_greedy_argmax_keep.1} parent=1 // pred_region
      %v63 = vld [vmem:[#allocation2] sm:$0xff]
      %vm64 = vcmp.gt.f32.partialorder %v33, %v63
      %v65 = vsel %vm64, %v33, %v63
      %vm66 = vcmask 7168
      %67 = vst.msk [vmem:[#allocation2] sm:$0xff] %vm66, %v65
      %v68 = vld [vmem:[%s1] sm:$0xff]
      %v69 = vsel %vm64, %v51, %v68
      %70 = vst.msk [vmem:[%s1] sm:$0xff] %vm66, %v69
    $region17: #{_greedy_argmax_keep.1} parent=1 // pred_fallthru
      _
    // Predicated region
    $region18: #{_greedy_argmax_keep.1} parent=1 // pred_check
      _
    $region19: #{_greedy_argmax_keep.1} parent=1 // pred_check_branch
      %72 = sbr.rel (0) target = $region21
    $region20: #{_greedy_argmax_keep.1} parent=1 // pred_region
      _
    $region21: #{_greedy_argmax_keep.1} parent=1 // pred_fallthru
      _
    // Predicated region
    $region22: #{_greedy_argmax_keep.1} parent=1 // pred_check
      _
    $region23: #{_greedy_argmax_keep.1} parent=1 // pred_check_branch
      %74 = sbr.rel (0) target = $region25
    $region24: #{_greedy_argmax_keep.1} parent=1 // pred_region
      _
    $region25: #{_greedy_argmax_keep.1} parent=1 // pred_fallthru
      _
    %75 = vsyncpa [#allocation4], 1

</llo_original>
